<compile_context>
chip_gen: v7x
topology: tpu7x:2x2x1
jax: 0.10.0
libtpu: 0.0.40
codegen_flags: <defaults>
</compile_context>

<pallas_src>
import jax
import jax.numpy as jnp
from jax.experimental import pallas as pl
from jax.experimental.pallas import tpu as pltpu


# ----------------------------------------------------------------------------
# Kernels
# ----------------------------------------------------------------------------
def _adapter_copy_kernel(x_ref, o_ref):
    # Identity copy of the current (TR, L) tile ("view" semantics, materialized).
    o_ref[...] = x_ref[...]


def _adapter_dma_copy_kernel(x_ref, o_ref, sem):
    # Whole-slab HBM->HBM DMA: no VMEM staging, no vld/vst, no grid overhead.
    cp = pltpu.make_async_copy(x_ref, o_ref, sem)
    cp.start()
    cp.wait()


# ----------------------------------------------------------------------------
# Tiling helpers (VMEM path)
# ----------------------------------------------------------------------------
def _choose_lane_width(total, output_size, itemsize):
    """Largest lane-dense width (multiple of 128, capped at 4096 elements) that
    evenly divides the element count; falls back to the original outputSize
    (which may be < 128 -> masked stores, unavoidable for such totals)."""
    if total % 128 != 0:
        return output_size
    q = total // 128
    max_mult = max(1, min(q, 32))  # lane <= 4096 elements
    best = 1
    for m in range(1, max_mult + 1):
        if q % m == 0:
            best = m
    return 128 * best


def _choose_row_tile(rows, lane, itemsize, target_bytes=8 << 20):
    """Row-tile: sublane-quantum aligned, <= ~8 MiB per buffer.  No exact
    divisibility required -- a ragged last block is handled by pl.cdiv grid."""
    sub_mult = 8 * max(1, 4 // max(1, itemsize))  # f32->8, bf16->16, int8->32
    if rows <= sub_mult:
        return rows  # full-extent block (allowed regardless of alignment)
    cap = max(sub_mult, target_bytes // max(1, lane * itemsize))
    tr = min(rows, cap)
    tr = (tr // sub_mult) * sub_mult
    return max(tr, sub_mult)


# ----------------------------------------------------------------------------
# Materializing copies
# ----------------------------------------------------------------------------
def _dma_copy(x2d):
    """Direct HBM->HBM DMA copy of the whole slab (preferred materialize path)."""
    return pl.pallas_call(
        _adapter_dma_copy_kernel,
        out_shape=jax.ShapeDtypeStruct(x2d.shape, x2d.dtype),
        in_specs=[pl.BlockSpec(memory_space=pl.ANY)],
        out_specs=pl.BlockSpec(memory_space=pl.ANY),
        scratch_shapes=[pltpu.SemaphoreType.DMA],
    )(x2d)


def _vmem_copy(x2d, donate):
    """Tiled, software-pipelined VMEM identity copy."""
    rows, lane = x2d.shape
    itemsize = jnp.dtype(x2d.dtype).itemsize
    tr = _choose_row_tile(rows, lane, itemsize)
    grid = (pl.cdiv(rows, tr),)

    return pl.pallas_call(
        _adapter_copy_kernel,
        out_shape=jax.ShapeDtypeStruct((rows, lane), x2d.dtype),
        grid_spec=pl.GridSpec(
            grid=grid,
            in_specs=[pl.BlockSpec((tr, lane), lambda i: (i, 0))],
            out_specs=pl.BlockSpec((tr, lane), lambda i: (i, 0)),
        ),
        # Opt-in only: aliasing without real donation forces a hidden copy.
        input_output_aliases=({0: 0} if donate else {}),
        compiler_params=pltpu.CompilerParams(
            # "parallel": shards row tiles across both v7x TensorCores.
            dimension_semantics=("parallel",),
            # Explicit, generation-safe limit: 4 x 8 MiB double-buffered
            # tiles + headroom; within v7x's 64 MiB/TC physical VMEM.
            vmem_limit_bytes=48 * 1024 * 1024,
        ),
    )(x2d)


# ----------------------------------------------------------------------------
# Public wrapper
# ----------------------------------------------------------------------------
def conv1d_adapter(x, output_size, is_in, materialize=False, method="dma",
                   donate=False):
    """JAX equivalent of _Conv1dAdapter(output_size, is_in).forward(x).

    materialize=False (default): pure metadata reshape -- matches torch.view
        semantics exactly and costs nothing (recommended).
    materialize=True: force an HBM round trip.
        method="dma"  (default): whole-slab HBM->HBM DMA copy.
        method="vmem": tiled, pipelined VMEM identity copy.
    donate=True (vmem path only): alias the output onto the input buffer;
        only set this if the caller actually donates x.
    """
    total = x.size
    assert total % output_size == 0, "x cannot be viewed as (-1, outputSize)"
    rows = total // output_size
    out_shape = (rows, 1, output_size) if is_in else (rows, output_size)

    if not materialize:
        # The op is a pure view; reshape is metadata-only in XLA.
        return jnp.reshape(x, out_shape)

    # Lane-dense slab for the copy; the trailing reshape back to the
    # PyTorch view shape is free (row-major order preserved throughout).
    itemsize = jnp.dtype(x.dtype).itemsize
    lane = _choose_lane_width(total, output_size, itemsize)
    x2d = jnp.reshape(x, (total // lane, lane))

    if method == "dma":
        out2d = _dma_copy(x2d)
    elif method == "vmem":
        out2d = _vmem_copy(x2d, donate)
    else:
        raise ValueError(f"unknown method: {method!r}")

    return jnp.reshape(out2d, out_shape)


# ----------------------------------------------------------------------------
# Self-test
# ----------------------------------------------------------------------------
if __name__ == "__main__":
    key = jax.random.PRNGKey(0)
    k0, k1, k2 = jax.random.split(key, 3)

    # --- Case 1: small NCW conv1d-style input, outputSize=16 -----------------
    output_size = 16
    x = jax.random.normal(k0, (2, 4, 16), dtype=jnp.float32)
    ref_in = jnp.reshape(x, (-1, 1, output_size))
    ref_flat = jnp.reshape(x, (-1, output_size))

    # Default (view-only) path.
    out_view = jax.block_until_ready(conv1d_adapter(x, output_size, is_in=True))
    assert out_view.shape == (8, 1, 16)
    assert jnp.array_equal(out_view, ref_in)

    # Materializing DMA path, isIn=True -> (-1, 1, outputSize).
    out_dma = jax.block_until_ready(
        conv1d_adapter(x, output_size, is_in=True, materialize=True, method="dma"))
    assert out_dma.shape == (8, 1, 16), out_dma.shape
    assert out_dma.dtype == x.dtype
    assert jnp.array_equal(out_dma, ref_in)

    # Materializing VMEM path, isIn=False -> (-1, outputSize).
    out_vmem = jax.block_until_ready(
        conv1d_adapter(x, output_size, is_in=False, materialize=True, method="vmem"))
    assert out_vmem.shape == (8, 16), out_vmem.shape
    assert jnp.array_equal(out_vmem, ref_flat)

    # --- Case 2: element count divisible by 128 -> lane-dense slab -----------
    output_size2 = 256
    x2 = jax.random.normal(k1, (8, 8, 256), dtype=jnp.float32)  # 16384 elems
    ref2 = jnp.reshape(x2, (-1, 1, output_size2))
    out2_dma = jax.block_until_ready(
        conv1d_adapter(x2, output_size2, is_in=True, materialize=True, method="dma"))
    assert out2_dma.shape == (64, 1, 256), out2_dma.shape
    assert jnp.array_equal(out2_dma, ref2)
    out2_vmem = jax.block_until_ready(
        conv1d_adapter(x2, output_size2, is_in=True, materialize=True, method="vmem"))
    assert jnp.array_equal(out2_vmem, ref2)

    # --- Case 3: element count NOT divisible by 128 -> fallback lane width ---
    output_size3 = 24
    x3 = jax.random.normal(k2, (2, 3, 24), dtype=jnp.float32)  # 144 elems
    ref3 = jnp.reshape(x3, (-1, output_size3))
    out3_dma = jax.block_until_ready(
        conv1d_adapter(x3, output_size3, is_in=False, materialize=True, method="dma"))
    assert out3_dma.shape == (6, 24), out3_dma.shape
    assert jnp.array_equal(out3_dma, ref3)
    out3_vmem = jax.block_until_ready(
        conv1d_adapter(x3, output_size3, is_in=False, materialize=True, method="vmem"))
    assert jnp.array_equal(out3_vmem, ref3)

    # --- Case 4: ragged row count (not a multiple of the row tile) -----------
    output_size4 = 128
    x4 = jax.random.normal(k0, (10, 128), dtype=jnp.float32)  # rows=10 -> ragged
    ref4 = jnp.reshape(x4, (-1, output_size4))
    out4_vmem = jax.block_until_ready(
        conv1d_adapter(x4, output_size4, is_in=False, materialize=True, method="vmem"))
    assert out4_vmem.shape == (10, 128), out4_vmem.shape
    assert jnp.array_equal(out4_vmem, ref4)

    print("KERNEL_OK")
</pallas_src>

<mosaic_0001>
module attributes {stable_mosaic.version = 11 : i64} {
  func.func @_adapter_dma_copy_kernel(%arg0: memref<1x128xf32, #tpu.memory_space<any>>, %arg1: memref<1x128xf32, #tpu.memory_space<any>>, %arg2: memref<!tpu.dma_semaphore, #tpu.memory_space<semaphore_mem>>) attributes {dimension_semantics = [], scalar_prefetch = 0 : i64, scratch_operands = 1 : i64, tpu.core_type = #tpu.core_type<tc>} {
    tpu.enqueue_dma source(%arg0 : memref<1x128xf32, #tpu.memory_space<any>>) target(%arg1 : memref<1x128xf32, #tpu.memory_space<any>>) target_semaphore(%arg2 : memref<!tpu.dma_semaphore, #tpu.memory_space<semaphore_mem>>)
    tpu.wait_dma2 semaphore(%arg2 : memref<!tpu.dma_semaphore, #tpu.memory_space<semaphore_mem>>) src(%arg0 : memref<1x128xf32, #tpu.memory_space<any>>) dst(%arg1 : memref<1x128xf32, #tpu.memory_space<any>>)
    return
  }
}

</mosaic_0001>

<llo_original>
// kernel: tpu_custom_call.1
$region0: #{tpu_custom_call.1}
  #allocation0 [shape = 'u32[]', space=smem, size = 0x4, offset = 0x4, fixed_abs, tag = 'smem constant byte address 0x4 - core index']
  #allocation1 [shape = 'u32[144,128]{1,0:T(1,128)}', space=vmem, size = 0x12000, scoped, tag = 'internal scratch']
  #allocation2 [shape = 's32[1]{0}', space=sflag, size = 0x4, scoped, tag = 'scratch operand']
  #allocation3 [shape = 's32[]', space=sflag, size = 0x4, offset = 0, fixed_abs, tag = 'sflag constant byte address 0x0 - dummy sync flag']
  #allocation4 [shape = 'u32[0]{0}', space=smem, size = 0, offset = 0, fixed_abs, tag = 'smem constant byte address 0x0 - null']
  %s0 = inlined_call_operand.hbm [shape: f32[1,128], index: 0, kind: input, shape index: {}]
  %s1 = inlined_call_operand.hbm [shape: f32[1,128], index: 1, kind: output, shape index: {}]
  %s2 = sld [smem:[#allocation0]]
  $region2: #{tpu_custom_call.1} parent=0
    _
  %s4 = ssub.s32 1, %s2
  %s5 = scalar_select 0, %s4, %s2
  %s7 = sshll.u32 1, 14
  %s8 = sxor.u32 4294967295, %s7
  %s11 = sshll.u32 3, 24
  %s12 = sxor.u32 4294967295, %s11
  %s13 = sand.u32 0, %s12
  %s15 = sor.u32 %s13, 0
  %18 = dma.general %s0, 16, %s1, [#allocation2], [#allocation3], [#allocation4], %s15, 0
  %s19 = smul.u32 1, 1
  %s20 = sshll.u32 %s19, 4
  %21 = dma.done [#allocation2], %s20
  %22 = vsyncmov [#allocation2]
  %s23 = vpop.sfrf %22
  %p24 = scmp.eq.s32.totalorder %s23, 0
  %p25 = pneg %p24
  %27 = shalt.err (%p25)

</llo_original>
